<compile_context>
chip_gen: v7x
topology: tpu7x:2x2x1
jax: 0.10.0
libtpu: 0.0.40
codegen_flags: <defaults>
</compile_context>

<pallas_src>
import functools

import jax
import jax.numpy as jnp
import numpy as np
from jax import lax
from jax.experimental import pallas as pl
from jax.experimental.pallas import tpu as pltpu

EPS = 1e-8
LANES = 128
MAX_TR = 512  # rows (of 128 lanes) per grid step when tiling is required

# f32 erf rational approximation (same polynomial XLA uses for lax.erf in f32),
# built only from mul/add/div/clamp so it lowers cleanly in Mosaic.
_ERF_ALPHA = (0.00022905065861350646, 0.0034082910107109506,
              0.050955695062380861, 0.18520832239976145, 1.128379143519084)
_ERF_BETA = (-1.1791602954361697e-7, 2.3547966471313185e-5,
             0.0010179625278914885, 0.014070470171167667,
             0.11098505178285362, 0.49746925110067538, 1.0)
_ERF_CLAMP = 3.832506856900711


def _erf_f32(x):
    x = jnp.clip(x, -_ERF_CLAMP, _ERF_CLAMP)
    x2 = x * x

    def horner(coeffs):
        acc = jnp.full_like(x2, coeffs[0])
        for c in coeffs[1:]:
            acc = acc * x2 + c
        return acc

    return (x * horner(_ERF_ALPHA)) / horner(_ERF_BETA)


def _pcal(y1, y1v, y2, y2v):
    # rsqrt -> one EUP push instead of sqrt + reciprocal for the divide.
    return 0.5 * (1.0 + _erf_f32((y1 - y2) * lax.rsqrt(2.0 * (y1v + y2v))))


def _fid_elem(p, g):
    # Elementwise fidelity loss; the mean is folded into the finalize scaling.
    return 1.0 - (jnp.sqrt(p * g + EPS) + jnp.sqrt((1.0 - p) * (1.0 - g) + EPS))


def _ncl_kernel(y_ref, g_ref, out_ref, acc_ref, *, n, m, tr, have_g):
    r = pl.program_id(0)
    last = pl.num_programs(0) - 1

    @pl.when(r == 0)
    def _init():
        acc_ref[0] = jnp.float32(0.0)   # e2e numerator
        acc_ref[1] = jnp.float32(0.0)   # ind numerator
        acc_ref[2] = jnp.float32(0.0)   # div numerator

    y1 = y_ref[0]      # (n, TR, 128)
    y1v = y_ref[1]
    y2 = y_ref[2]
    y2v = y_ref[3]

    # Validity mask for lane/row padding: flattened element index < m.
    row = lax.broadcasted_iota(jnp.int32, (tr, LANES), 0)
    lane = lax.broadcasted_iota(jnp.int32, (tr, LANES), 1)
    flat = (r * tr + row) * LANES + lane
    mask = (flat < m).astype(jnp.float32)               # (TR, 128)

    # Per-member preference probabilities on full lane-dense tiles.
    p = _pcal(y1, y1v, y2, y2v)                         # (n, TR, 128)

    # Diversity: unordered member pairs, each on a dense (TR, 128) tile,
    # accumulated elementwise; single masked reduction per grid step.
    div_sum = jnp.zeros((tr, LANES), jnp.float32)
    for i in range(n):
        for j in range(i + 1, n):
            div_sum = div_sum + _fid_elem(p[i], p[j])
    acc_ref[2] += jnp.sum(div_sum * mask)

    if have_g:
        g = g_ref[...]                                  # (TR, 128)

        # Individual losses vs. g, vectorized over all n members at once.
        ind_sum = jnp.sum(_fid_elem(p, g), axis=0)      # (TR, 128)
        acc_ref[1] += jnp.sum(ind_sum * mask)

        # Ensemble-mean (end-to-end) path.
        inv_n = 1.0 / n
        p_bar = _pcal(jnp.sum(y1, axis=0) * inv_n,
                      jnp.sum(y1v, axis=0) * (inv_n * inv_n),
                      jnp.sum(y2, axis=0) * inv_n,
                      jnp.sum(y2v, axis=0) * (inv_n * inv_n))
        acc_ref[0] += jnp.sum(_fid_elem(p_bar, g) * mask)

    @pl.when(r == last)
    def _finalize():
        # Fold all per-pair / per-member means into one scale each.
        out_ref[2] = acc_ref[2] * jnp.float32(1.0 / (n * (n - 1) * m))
        if have_g:
            out_ref[1] = acc_ref[1] * jnp.float32(1.0 / (n * m))
            out_ref[0] = acc_ref[0] * jnp.float32(1.0 / m)
        else:
            out_ref[1] = jnp.float32(0.0)
            out_ref[0] = jnp.float32(0.0)


def _pack_member_list(xs, m, m_pad, pad_val):
    r_pad = m_pad // LANES
    rows = []
    for x in xs:
        v = jnp.ravel(x).astype(jnp.float32)
        if m_pad > m:
            v = jnp.pad(v, (0, m_pad - m), constant_values=pad_val)
        rows.append(v.reshape(r_pad, LANES))
    return jnp.stack(rows)                 # (n, r_pad, 128)


def ncl_loss(y1, y1_var, y2, y2_var, g=None):
    """y1, y1_var, y2, y2_var: lists (len n >= 2) of same-shaped arrays.

    Returns div_loss if g is None, else (e2e_loss, ind_loss, div_loss),
    matching the PyTorch Ncl_loss.forward semantics.
    """
    n = len(y1)
    assert n >= 2, "Ncl_loss needs at least 2 ensemble members"
    m = int(np.prod(np.shape(y1[0])))      # per-member element count

    r = -(-m // LANES)                      # rows of 128 lanes
    if r <= MAX_TR:
        tr, r_pad = r, r                    # single grid step, full block
    else:
        tr = MAX_TR                         # multiple of 8 -> valid tiling
        r_pad = -(-r // tr) * tr
    m_pad = r_pad * LANES

    # Pack all 4 prediction arrays into a single VMEM input (one DMA stream).
    # Variances padded with 1.0 so padded lanes never hit rsqrt(0).
    y_packed = jnp.stack([
        _pack_member_list(y1, m, m_pad, 0.0),
        _pack_member_list(y1_var, m, m_pad, 1.0),
        _pack_member_list(y2, m, m_pad, 0.0),
        _pack_member_list(y2_var, m, m_pad, 1.0),
    ])                                      # (4, n, r_pad, 128)

    have_g = g is not None
    if have_g:
        gv = jnp.ravel(g).astype(jnp.float32)
        if m_pad > m:
            gv = jnp.pad(gv, (0, m_pad - m), constant_values=0.5)
        gv = gv.reshape(r_pad, LANES)
    else:
        gv = jnp.full((r_pad, LANES), 0.5, jnp.float32)

    out = pl.pallas_call(
        functools.partial(_ncl_kernel, n=n, m=m, tr=tr, have_g=have_g),
        out_shape=jax.ShapeDtypeStruct((3,), jnp.float32),
        grid_spec=pltpu.PrefetchScalarGridSpec(
            num_scalar_prefetch=0,
            grid=(r_pad // tr,),
            in_specs=[
                pl.BlockSpec((4, n, tr, LANES), lambda b: (0, 0, b, 0)),
                pl.BlockSpec((tr, LANES), lambda b: (b, 0)),
            ],
            out_specs=pl.BlockSpec(memory_space=pltpu.MemorySpace.SMEM),
            scratch_shapes=[pltpu.SMEM((3,), jnp.float32)],
        ),
        compiler_params=pltpu.CompilerParams(
            dimension_semantics=("arbitrary",)),
    )(y_packed, gv)

    if have_g:
        return out[0], out[1], out[2]
    return out[2]


# -------------------- pure-JAX reference (mirrors the PyTorch code) ----------
def _ncl_ref(y1, y1_var, y2, y2_var, g):
    from jax.scipy.special import erf
    n = len(y1)

    def pcal(a, av, b, bv):
        return 0.5 * (1.0 + erf((a - b) / jnp.sqrt(2.0 * (av + bv))))

    def fid(p, gg):
        p = p.reshape(-1, 1)
        gg = gg.reshape(-1, 1)
        return jnp.mean(1.0 - (jnp.sqrt(p * gg + EPS)
                               + jnp.sqrt((1.0 - p) * (1.0 - gg) + EPS)))

    p = [pcal(y1[i], y1_var[i], y2[i], y2_var[i]) for i in range(n)]
    div = 0.0
    for i in range(n):
        for j in range(i + 1, n):
            div = div + fid(p[i], p[j])
    div = div / (n * (n - 1))
    ind = sum(fid(p[i], g) for i in range(n)) / n
    y1s = sum(y1); y1vs = sum(y1_var); y2s = sum(y2); y2vs = sum(y2_var)
    p_bar = pcal(y1s / n, y1vs / (n * n), y2s / n, y2vs / (n * n))
    e2e = fid(p_bar, g)
    return e2e, ind, div


def _make_inputs(key, n, shape):
    keys = jax.random.split(key, 4 * n + 1)
    y1 = [jax.random.normal(keys[i], shape, jnp.float32) for i in range(n)]
    y2 = [jax.random.normal(keys[n + i], shape, jnp.float32) for i in range(n)]
    y1v = [jax.random.uniform(keys[2 * n + i], shape, jnp.float32, 0.1, 1.0)
           for i in range(n)]
    y2v = [jax.random.uniform(keys[3 * n + i], shape, jnp.float32, 0.1, 1.0)
           for i in range(n)]
    g = jax.random.uniform(keys[-1], shape, jnp.float32, 0.05, 0.95)
    return y1, y1v, y2, y2v, g


if __name__ == "__main__":
    key = jax.random.PRNGKey(0)
    k_a, k_b = jax.random.split(key)

    # Case A: lane-aligned per-member shape (flattens to M=128), n=3.
    y1, y1v, y2, y2v, g = _make_inputs(k_a, 3, (16, 8))
    e2e, ind, div = jax.block_until_ready(ncl_loss(y1, y1v, y2, y2v, g))
    div_only = jax.block_until_ready(ncl_loss(y1, y1v, y2, y2v, None))
    e2e_r, ind_r, div_r = _ncl_ref(y1, y1v, y2, y2v, g)
    np.testing.assert_allclose(np.array(e2e), np.array(e2e_r), rtol=5e-4, atol=1e-5)
    np.testing.assert_allclose(np.array(ind), np.array(ind_r), rtol=5e-4, atol=1e-5)
    np.testing.assert_allclose(np.array(div), np.array(div_r), rtol=5e-4, atol=1e-5)
    np.testing.assert_allclose(np.array(div_only), np.array(div_r), rtol=5e-4, atol=1e-5)

    # Case B: non-lane-aligned shape (M=260 -> padded/masked, R=3 rows), n=4.
    y1, y1v, y2, y2v, g = _make_inputs(k_b, 4, (20, 13))
    e2e, ind, div = jax.block_until_ready(ncl_loss(y1, y1v, y2, y2v, g))
    e2e_r, ind_r, div_r = _ncl_ref(y1, y1v, y2, y2v, g)
    np.testing.assert_allclose(np.array(e2e), np.array(e2e_r), rtol=5e-4, atol=1e-5)
    np.testing.assert_allclose(np.array(ind), np.array(ind_r), rtol=5e-4, atol=1e-5)
    np.testing.assert_allclose(np.array(div), np.array(div_r), rtol=5e-4, atol=1e-5)

    print("KERNEL_OK")
</pallas_src>

<mosaic_0001>
module attributes {stable_mosaic.version = 11 : i64} {
  func.func @_ncl_kernel(%arg0: i32, %arg1: memref<4x3x1x128xf32, #tpu.memory_space<vmem>>, %arg2: memref<1x128xf32, #tpu.memory_space<vmem>>, %arg3: memref<3xf32, #tpu.memory_space<smem>>, %arg4: memref<3xf32, #tpu.memory_space<smem>>) attributes {dimension_semantics = [#tpu.dimension_semantics<arbitrary>], iteration_bounds = array<i64: 1>, scalar_prefetch = 0 : i64, scratch_operands = 1 : i64, tpu.core_type = #tpu.core_type<tc>, window_params = [{transform_indices = @transform_0, window_bounds = array<i64: 4, 3, 1, 128>}, {transform_indices = @transform_1, window_bounds = array<i64: 1, 128>}, {transform_indices = @transform_2, window_bounds = array<i64: 3>}]} {
    %c0_i32 = arith.constant 0 : i32
    %0 = arith.cmpi eq, %arg0, %c0_i32 : i32
    %1 = arith.extui %0 : i1 to i32
    %c0_i32_0 = arith.constant 0 : i32
    %2 = arith.cmpi ne, %1, %c0_i32_0 : i32
    scf.if %2 {
      %cst_95 = arith.constant 0.000000e+00 : f32
      %c0_96 = arith.constant 0 : index
      %257 = memref.load %arg4[%c0_96] : memref<3xf32, #tpu.memory_space<smem>>
      memref.store %cst_95, %arg4[%c0_96] : memref<3xf32, #tpu.memory_space<smem>>
      %cst_97 = arith.constant 0.000000e+00 : f32
      %c1_98 = arith.constant 1 : index
      %258 = memref.load %arg4[%c1_98] : memref<3xf32, #tpu.memory_space<smem>>
      memref.store %cst_97, %arg4[%c1_98] : memref<3xf32, #tpu.memory_space<smem>>
      %cst_99 = arith.constant 0.000000e+00 : f32
      %c2_100 = arith.constant 2 : index
      %259 = memref.load %arg4[%c2_100] : memref<3xf32, #tpu.memory_space<smem>>
      memref.store %cst_99, %arg4[%c2_100] : memref<3xf32, #tpu.memory_space<smem>>
    } else {
    }
    %c0 = arith.constant 0 : index
    %c0_1 = arith.constant 0 : index
    %c0_2 = arith.constant 0 : index
    %c0_3 = arith.constant 0 : index
    %3 = vector.load %arg1[%c0, %c0_1, %c0_2, %c0_3] : memref<4x3x1x128xf32, #tpu.memory_space<vmem>>, vector<1x3x1x128xf32>
    %4 = vector.shape_cast %3 : vector<1x3x1x128xf32> to vector<3x1x128xf32>
    %c1 = arith.constant 1 : index
    %c0_4 = arith.constant 0 : index
    %c0_5 = arith.constant 0 : index
    %c0_6 = arith.constant 0 : index
    %5 = vector.load %arg1[%c1, %c0_4, %c0_5, %c0_6] : memref<4x3x1x128xf32, #tpu.memory_space<vmem>>, vector<1x3x1x128xf32>
    %6 = vector.shape_cast %5 : vector<1x3x1x128xf32> to vector<3x1x128xf32>
    %c2 = arith.constant 2 : index
    %c0_7 = arith.constant 0 : index
    %c0_8 = arith.constant 0 : index
    %c0_9 = arith.constant 0 : index
    %7 = vector.load %arg1[%c2, %c0_7, %c0_8, %c0_9] : memref<4x3x1x128xf32, #tpu.memory_space<vmem>>, vector<1x3x1x128xf32>
    %8 = vector.shape_cast %7 : vector<1x3x1x128xf32> to vector<3x1x128xf32>
    %c3 = arith.constant 3 : index
    %c0_10 = arith.constant 0 : index
    %c0_11 = arith.constant 0 : index
    %c0_12 = arith.constant 0 : index
    %9 = vector.load %arg1[%c3, %c0_10, %c0_11, %c0_12] : memref<4x3x1x128xf32, #tpu.memory_space<vmem>>, vector<1x3x1x128xf32>
    %10 = vector.shape_cast %9 : vector<1x3x1x128xf32> to vector<3x1x128xf32>
    %11 = tpu.iota {dimensions = array<i32: 0>} : vector<1x128xi32>
    %12 = tpu.iota {dimensions = array<i32: 1>} : vector<1x128xi32>
    %c1_i32 = arith.constant 1 : i32
    %13 = arith.muli %arg0, %c1_i32 : i32
    %14 = vector.broadcast %13 : i32 to vector<1x128xi32>
    %15 = arith.addi %14, %11 : vector<1x128xi32>
    %c128_i32 = arith.constant 128 : i32
    %16 = vector.broadcast %c128_i32 : i32 to vector<1x128xi32>
    %17 = arith.muli %15, %16 : vector<1x128xi32>
    %18 = arith.addi %17, %12 : vector<1x128xi32>
    %c128_i32_13 = arith.constant 128 : i32
    %19 = vector.broadcast %c128_i32_13 : i32 to vector<1x128xi32>
    %20 = arith.cmpi slt, %18, %19 : vector<1x128xi32>
    %21 = arith.extui %20 : vector<1x128xi1> to vector<1x128xi32>
    %22 = arith.sitofp %21 : vector<1x128xi32> to vector<1x128xf32>
    %23 = arith.subf %4, %8 : vector<3x1x128xf32>
    %24 = arith.addf %6, %10 : vector<3x1x128xf32>
    %cst = arith.constant 2.000000e+00 : f32
    %25 = vector.broadcast %cst : f32 to vector<3x1x128xf32>
    %26 = arith.mulf %25, %24 : vector<3x1x128xf32>
    %27 = math.rsqrt %26 : vector<3x1x128xf32>
    %28 = arith.mulf %23, %27 : vector<3x1x128xf32>
    %cst_14 = arith.constant -3.8325069 : f32
    %cst_15 = arith.constant 3.8325069 : f32
    %29 = vector.broadcast %cst_14 : f32 to vector<3x1x128xf32>
    %30 = arith.maximumf %29, %28 : vector<3x1x128xf32>
    %31 = vector.broadcast %cst_15 : f32 to vector<3x1x128xf32>
    %32 = arith.minimumf %31, %30 : vector<3x1x128xf32>
    %33 = arith.mulf %32, %32 : vector<3x1x128xf32>
    %cst_16 = arith.constant 2.29050653E-4 : f32
    %34 = vector.broadcast %cst_16 : f32 to vector<3x1x128xf32>
    %35 = arith.mulf %34, %33 : vector<3x1x128xf32>
    %cst_17 = arith.constant 0.00340829091 : f32
    %36 = vector.broadcast %cst_17 : f32 to vector<3x1x128xf32>
    %37 = arith.addf %35, %36 : vector<3x1x128xf32>
    %38 = arith.mulf %37, %33 : vector<3x1x128xf32>
    %cst_18 = arith.constant 0.0509556942 : f32
    %39 = vector.broadcast %cst_18 : f32 to vector<3x1x128xf32>
    %40 = arith.addf %38, %39 : vector<3x1x128xf32>
    %41 = arith.mulf %40, %33 : vector<3x1x128xf32>
    %cst_19 = arith.constant 0.185208321 : f32
    %42 = vector.broadcast %cst_19 : f32 to vector<3x1x128xf32>
    %43 = arith.addf %41, %42 : vector<3x1x128xf32>
    %44 = arith.mulf %43, %33 : vector<3x1x128xf32>
    %cst_20 = arith.constant 1.12837911 : f32
    %45 = vector.broadcast %cst_20 : f32 to vector<3x1x128xf32>
    %46 = arith.addf %44, %45 : vector<3x1x128xf32>
    %47 = arith.mulf %32, %46 : vector<3x1x128xf32>
    %cst_21 = arith.constant -1.17916031E-7 : f32
    %48 = vector.broadcast %cst_21 : f32 to vector<3x1x128xf32>
    %49 = arith.mulf %48, %33 : vector<3x1x128xf32>
    %cst_22 = arith.constant 2.35479656E-5 : f32
    %50 = vector.broadcast %cst_22 : f32 to vector<3x1x128xf32>
    %51 = arith.addf %49, %50 : vector<3x1x128xf32>
    %52 = arith.mulf %51, %33 : vector<3x1x128xf32>
    %cst_23 = arith.constant 0.00101796258 : f32
    %53 = vector.broadcast %cst_23 : f32 to vector<3x1x128xf32>
    %54 = arith.addf %52, %53 : vector<3x1x128xf32>
    %55 = arith.mulf %54, %33 : vector<3x1x128xf32>
    %cst_24 = arith.constant 0.0140704699 : f32
    %56 = vector.broadcast %cst_24 : f32 to vector<3x1x128xf32>
    %57 = arith.addf %55, %56 : vector<3x1x128xf32>
    %58 = arith.mulf %57, %33 : vector<3x1x128xf32>
    %cst_25 = arith.constant 0.110985048 : f32
    %59 = vector.broadcast %cst_25 : f32 to vector<3x1x128xf32>
    %60 = arith.addf %58, %59 : vector<3x1x128xf32>
    %61 = arith.mulf %60, %33 : vector<3x1x128xf32>
    %cst_26 = arith.constant 0.497469246 : f32
    %62 = vector.broadcast %cst_26 : f32 to vector<3x1x128xf32>
    %63 = arith.addf %61, %62 : vector<3x1x128xf32>
    %64 = arith.mulf %63, %33 : vector<3x1x128xf32>
    %cst_27 = arith.constant 1.000000e+00 : f32
    %65 = vector.broadcast %cst_27 : f32 to vector<3x1x128xf32>
    %66 = arith.addf %64, %65 : vector<3x1x128xf32>
    %67 = arith.divf %47, %66 : vector<3x1x128xf32>
    %cst_28 = arith.constant 1.000000e+00 : f32
    %68 = vector.broadcast %cst_28 : f32 to vector<3x1x128xf32>
    %69 = arith.addf %68, %67 : vector<3x1x128xf32>
    %cst_29 = arith.constant 5.000000e-01 : f32
    %70 = vector.broadcast %cst_29 : f32 to vector<3x1x128xf32>
    %71 = arith.mulf %70, %69 : vector<3x1x128xf32>
    %cst_30 = arith.constant 0.000000e+00 : f32
    %72 = vector.broadcast %cst_30 : f32 to vector<1x128xf32>
    %73 = vector.extract_strided_slice %71 {offsets = [0, 0, 0], sizes = [1, 1, 128], strides = [1, 1, 1]} : vector<3x1x128xf32> to vector<1x1x128xf32>
    %74 = vector.shape_cast %73 : vector<1x1x128xf32> to vector<1x128xf32>
    %75 = vector.extract_strided_slice %71 {offsets = [1, 0, 0], sizes = [1, 1, 128], strides = [1, 1, 1]} : vector<3x1x128xf32> to vector<1x1x128xf32>
    %76 = vector.shape_cast %75 : vector<1x1x128xf32> to vector<1x128xf32>
    %77 = arith.mulf %74, %76 : vector<1x128xf32>
    %cst_31 = arith.constant 9.99999993E-9 : f32
    %78 = vector.broadcast %cst_31 : f32 to vector<1x128xf32>
    %79 = arith.addf %77, %78 : vector<1x128xf32>
    %80 = math.sqrt %79 : vector<1x128xf32>
    %cst_32 = arith.constant 1.000000e+00 : f32
    %81 = vector.broadcast %cst_32 : f32 to vector<1x128xf32>
    %82 = arith.subf %81, %74 : vector<1x128xf32>
    %cst_33 = arith.constant 1.000000e+00 : f32
    %83 = vector.broadcast %cst_33 : f32 to vector<1x128xf32>
    %84 = arith.subf %83, %76 : vector<1x128xf32>
    %85 = arith.mulf %82, %84 : vector<1x128xf32>
    %cst_34 = arith.constant 9.99999993E-9 : f32
    %86 = vector.broadcast %cst_34 : f32 to vector<1x128xf32>
    %87 = arith.addf %85, %86 : vector<1x128xf32>
    %88 = math.sqrt %87 : vector<1x128xf32>
    %89 = arith.addf %80, %88 : vector<1x128xf32>
    %cst_35 = arith.constant 1.000000e+00 : f32
    %90 = vector.broadcast %cst_35 : f32 to vector<1x128xf32>
    %91 = arith.subf %90, %89 : vector<1x128xf32>
    %92 = arith.addf %72, %91 : vector<1x128xf32>
    %93 = vector.extract_strided_slice %71 {offsets = [0, 0, 0], sizes = [1, 1, 128], strides = [1, 1, 1]} : vector<3x1x128xf32> to vector<1x1x128xf32>
    %94 = vector.shape_cast %93 : vector<1x1x128xf32> to vector<1x128xf32>
    %95 = vector.extract_strided_slice %71 {offsets = [2, 0, 0], sizes = [1, 1, 128], strides = [1, 1, 1]} : vector<3x1x128xf32> to vector<1x1x128xf32>
    %96 = vector.shape_cast %95 : vector<1x1x128xf32> to vector<1x128xf32>
    %97 = arith.mulf %94, %96 : vector<1x128xf32>
    %cst_36 = arith.constant 9.99999993E-9 : f32
    %98 = vector.broadcast %cst_36 : f32 to vector<1x128xf32>
    %99 = arith.addf %97, %98 : vector<1x128xf32>
    %100 = math.sqrt %99 : vector<1x128xf32>
    %cst_37 = arith.constant 1.000000e+00 : f32
    %101 = vector.broadcast %cst_37 : f32 to vector<1x128xf32>
    %102 = arith.subf %101, %94 : vector<1x128xf32>
    %cst_38 = arith.constant 1.000000e+00 : f32
    %103 = vector.broadcast %cst_38 : f32 to vector<1x128xf32>
    %104 = arith.subf %103, %96 : vector<1x128xf32>
    %105 = arith.mulf %102, %104 : vector<1x128xf32>
    %cst_39 = arith.constant 9.99999993E-9 : f32
    %106 = vector.broadcast %cst_39 : f32 to vector<1x128xf32>
    %107 = arith.addf %105, %106 : vector<1x128xf32>
    %108 = math.sqrt %107 : vector<1x128xf32>
    %109 = arith.addf %100, %108 : vector<1x128xf32>
    %cst_40 = arith.constant 1.000000e+00 : f32
    %110 = vector.broadcast %cst_40 : f32 to vector<1x128xf32>
    %111 = arith.subf %110, %109 : vector<1x128xf32>
    %112 = arith.addf %92, %111 : vector<1x128xf32>
    %113 = vector.extract_strided_slice %71 {offsets = [1, 0, 0], sizes = [1, 1, 128], strides = [1, 1, 1]} : vector<3x1x128xf32> to vector<1x1x128xf32>
    %114 = vector.shape_cast %113 : vector<1x1x128xf32> to vector<1x128xf32>
    %115 = vector.extract_strided_slice %71 {offsets = [2, 0, 0], sizes = [1, 1, 128], strides = [1, 1, 1]} : vector<3x1x128xf32> to vector<1x1x128xf32>
    %116 = vector.shape_cast %115 : vector<1x1x128xf32> to vector<1x128xf32>
    %117 = arith.mulf %114, %116 : vector<1x128xf32>
    %cst_41 = arith.constant 9.99999993E-9 : f32
    %118 = vector.broadcast %cst_41 : f32 to vector<1x128xf32>
    %119 = arith.addf %117, %118 : vector<1x128xf32>
    %120 = math.sqrt %119 : vector<1x128xf32>
    %cst_42 = arith.constant 1.000000e+00 : f32
    %121 = vector.broadcast %cst_42 : f32 to vector<1x128xf32>
    %122 = arith.subf %121, %114 : vector<1x128xf32>
    %cst_43 = arith.constant 1.000000e+00 : f32
    %123 = vector.broadcast %cst_43 : f32 to vector<1x128xf32>
    %124 = arith.subf %123, %116 : vector<1x128xf32>
    %125 = arith.mulf %122, %124 : vector<1x128xf32>
    %cst_44 = arith.constant 9.99999993E-9 : f32
    %126 = vector.broadcast %cst_44 : f32 to vector<1x128xf32>
    %127 = arith.addf %125, %126 : vector<1x128xf32>
    %128 = math.sqrt %127 : vector<1x128xf32>
    %129 = arith.addf %120, %128 : vector<1x128xf32>
    %cst_45 = arith.constant 1.000000e+00 : f32
    %130 = vector.broadcast %cst_45 : f32 to vector<1x128xf32>
    %131 = arith.subf %130, %129 : vector<1x128xf32>
    %132 = arith.addf %112, %131 : vector<1x128xf32>
    %c2_46 = arith.constant 2 : index
    %133 = memref.load %arg4[%c2_46] : memref<3xf32, #tpu.memory_space<smem>>
    %134 = arith.mulf %132, %22 : vector<1x128xf32>
    %135 = vector.shape_cast %134 : vector<1x128xf32> to vector<1x1x128xf32>
    %cst_47 = arith.constant dense<0.000000e+00> : vector<1xf32>
    %136 = vector.multi_reduction <add>, %135, %cst_47 [1, 2] : vector<1x1x128xf32> to vector<1xf32>
    %137 = vector.shape_cast %136 : vector<1xf32> to vector<1x1x1xf32>
    %138 = vector.extract %137[0, 0, 0] : f32 from vector<1x1x1xf32>
    %139 = arith.addf %133, %138 : f32
    %c2_48 = arith.constant 2 : index
    %140 = memref.load %arg4[%c2_48] : memref<3xf32, #tpu.memory_space<smem>>
    memref.store %139, %arg4[%c2_48] : memref<3xf32, #tpu.memory_space<smem>>
    %c0_49 = arith.constant 0 : index
    %c0_50 = arith.constant 0 : index
    %141 = vector.load %arg2[%c0_49, %c0_50] : memref<1x128xf32, #tpu.memory_space<vmem>>, vector<1x128xf32>
    %142 = vector.shape_cast %141 : vector<1x128xf32> to vector<1x1x128xf32>
    %143 = vector.broadcast %142 : vector<1x1x128xf32> to vector<3x1x128xf32>
    %144 = arith.mulf %71, %143 : vector<3x1x128xf32>
    %cst_51 = arith.constant 9.99999993E-9 : f32
    %145 = vector.broadcast %cst_51 : f32 to vector<3x1x128xf32>
    %146 = arith.addf %144, %145 : vector<3x1x128xf32>
    %147 = math.sqrt %146 : vector<3x1x128xf32>
    %cst_52 = arith.constant 1.000000e+00 : f32
    %148 = vector.broadcast %cst_52 : f32 to vector<3x1x128xf32>
    %149 = arith.subf %148, %71 : vector<3x1x128xf32>
    %cst_53 = arith.constant 1.000000e+00 : f32
    %150 = vector.broadcast %cst_53 : f32 to vector<1x128xf32>
    %151 = arith.subf %150, %141 : vector<1x128xf32>
    %152 = vector.shape_cast %151 : vector<1x128xf32> to vector<1x1x128xf32>
    %153 = vector.broadcast %152 : vector<1x1x128xf32> to vector<3x1x128xf32>
    %154 = arith.mulf %149, %153 : vector<3x1x128xf32>
    %cst_54 = arith.constant 9.99999993E-9 : f32
    %155 = vector.broadcast %cst_54 : f32 to vector<3x1x128xf32>
    %156 = arith.addf %154, %155 : vector<3x1x128xf32>
    %157 = math.sqrt %156 : vector<3x1x128xf32>
    %158 = arith.addf %147, %157 : vector<3x1x128xf32>
    %cst_55 = arith.constant 1.000000e+00 : f32
    %159 = vector.broadcast %cst_55 : f32 to vector<3x1x128xf32>
    %160 = arith.subf %159, %158 : vector<3x1x128xf32>
    %cst_56 = arith.constant dense<0.000000e+00> : vector<1x128xf32>
    %161 = vector.multi_reduction <add>, %160, %cst_56 [0] : vector<3x1x128xf32> to vector<1x128xf32>
    %c1_57 = arith.constant 1 : index
    %162 = memref.load %arg4[%c1_57] : memref<3xf32, #tpu.memory_space<smem>>
    %163 = arith.mulf %161, %22 : vector<1x128xf32>
    %164 = vector.shape_cast %163 : vector<1x128xf32> to vector<1x1x128xf32>
    %cst_58 = arith.constant dense<0.000000e+00> : vector<1xf32>
    %165 = vector.multi_reduction <add>, %164, %cst_58 [1, 2] : vector<1x1x128xf32> to vector<1xf32>
    %166 = vector.shape_cast %165 : vector<1xf32> to vector<1x1x1xf32>
    %167 = vector.extract %166[0, 0, 0] : f32 from vector<1x1x1xf32>
    %168 = arith.addf %162, %167 : f32
    %c1_59 = arith.constant 1 : index
    %169 = memref.load %arg4[%c1_59] : memref<3xf32, #tpu.memory_space<smem>>
    memref.store %168, %arg4[%c1_59] : memref<3xf32, #tpu.memory_space<smem>>
    %cst_60 = arith.constant dense<0.000000e+00> : vector<1x128xf32>
    %170 = vector.multi_reduction <add>, %4, %cst_60 [0] : vector<3x1x128xf32> to vector<1x128xf32>
    %cst_61 = arith.constant 0.333333343 : f32
    %171 = vector.broadcast %cst_61 : f32 to vector<1x128xf32>
    %172 = arith.mulf %170, %171 : vector<1x128xf32>
    %cst_62 = arith.constant dense<0.000000e+00> : vector<1x128xf32>
    %173 = vector.multi_reduction <add>, %6, %cst_62 [0] : vector<3x1x128xf32> to vector<1x128xf32>
    %cst_63 = arith.constant 0.111111112 : f32
    %174 = vector.broadcast %cst_63 : f32 to vector<1x128xf32>
    %175 = arith.mulf %173, %174 : vector<1x128xf32>
    %cst_64 = arith.constant dense<0.000000e+00> : vector<1x128xf32>
    %176 = vector.multi_reduction <add>, %8, %cst_64 [0] : vector<3x1x128xf32> to vector<1x128xf32>
    %cst_65 = arith.constant 0.333333343 : f32
    %177 = vector.broadcast %cst_65 : f32 to vector<1x128xf32>
    %178 = arith.mulf %176, %177 : vector<1x128xf32>
    %cst_66 = arith.constant dense<0.000000e+00> : vector<1x128xf32>
    %179 = vector.multi_reduction <add>, %10, %cst_66 [0] : vector<3x1x128xf32> to vector<1x128xf32>
    %cst_67 = arith.constant 0.111111112 : f32
    %180 = vector.broadcast %cst_67 : f32 to vector<1x128xf32>
    %181 = arith.mulf %179, %180 : vector<1x128xf32>
    %182 = arith.subf %172, %178 : vector<1x128xf32>
    %183 = arith.addf %175, %181 : vector<1x128xf32>
    %cst_68 = arith.constant 2.000000e+00 : f32
    %184 = vector.broadcast %cst_68 : f32 to vector<1x128xf32>
    %185 = arith.mulf %184, %183 : vector<1x128xf32>
    %186 = math.rsqrt %185 : vector<1x128xf32>
    %187 = arith.mulf %182, %186 : vector<1x128xf32>
    %cst_69 = arith.constant -3.8325069 : f32
    %cst_70 = arith.constant 3.8325069 : f32
    %188 = vector.broadcast %cst_69 : f32 to vector<1x128xf32>
    %189 = arith.maximumf %188, %187 : vector<1x128xf32>
    %190 = vector.broadcast %cst_70 : f32 to vector<1x128xf32>
    %191 = arith.minimumf %190, %189 : vector<1x128xf32>
    %192 = arith.mulf %191, %191 : vector<1x128xf32>
    %cst_71 = arith.constant 2.29050653E-4 : f32
    %193 = vector.broadcast %cst_71 : f32 to vector<1x128xf32>
    %194 = arith.mulf %193, %192 : vector<1x128xf32>
    %cst_72 = arith.constant 0.00340829091 : f32
    %195 = vector.broadcast %cst_72 : f32 to vector<1x128xf32>
    %196 = arith.addf %194, %195 : vector<1x128xf32>
    %197 = arith.mulf %196, %192 : vector<1x128xf32>
    %cst_73 = arith.constant 0.0509556942 : f32
    %198 = vector.broadcast %cst_73 : f32 to vector<1x128xf32>
    %199 = arith.addf %197, %198 : vector<1x128xf32>
    %200 = arith.mulf %199, %192 : vector<1x128xf32>
    %cst_74 = arith.constant 0.185208321 : f32
    %201 = vector.broadcast %cst_74 : f32 to vector<1x128xf32>
    %202 = arith.addf %200, %201 : vector<1x128xf32>
    %203 = arith.mulf %202, %192 : vector<1x128xf32>
    %cst_75 = arith.constant 1.12837911 : f32
    %204 = vector.broadcast %cst_75 : f32 to vector<1x128xf32>
    %205 = arith.addf %203, %204 : vector<1x128xf32>
    %206 = arith.mulf %191, %205 : vector<1x128xf32>
    %cst_76 = arith.constant -1.17916031E-7 : f32
    %207 = vector.broadcast %cst_76 : f32 to vector<1x128xf32>
    %208 = arith.mulf %207, %192 : vector<1x128xf32>
    %cst_77 = arith.constant 2.35479656E-5 : f32
    %209 = vector.broadcast %cst_77 : f32 to vector<1x128xf32>
    %210 = arith.addf %208, %209 : vector<1x128xf32>
    %211 = arith.mulf %210, %192 : vector<1x128xf32>
    %cst_78 = arith.constant 0.00101796258 : f32
    %212 = vector.broadcast %cst_78 : f32 to vector<1x128xf32>
    %213 = arith.addf %211, %212 : vector<1x128xf32>
    %214 = arith.mulf %213, %192 : vector<1x128xf32>
    %cst_79 = arith.constant 0.0140704699 : f32
    %215 = vector.broadcast %cst_79 : f32 to vector<1x128xf32>
    %216 = arith.addf %214, %215 : vector<1x128xf32>
    %217 = arith.mulf %216, %192 : vector<1x128xf32>
    %cst_80 = arith.constant 0.110985048 : f32
    %218 = vector.broadcast %cst_80 : f32 to vector<1x128xf32>
    %219 = arith.addf %217, %218 : vector<1x128xf32>
    %220 = arith.mulf %219, %192 : vector<1x128xf32>
    %cst_81 = arith.constant 0.497469246 : f32
    %221 = vector.broadcast %cst_81 : f32 to vector<1x128xf32>
    %222 = arith.addf %220, %221 : vector<1x128xf32>
    %223 = arith.mulf %222, %192 : vector<1x128xf32>
    %cst_82 = arith.constant 1.000000e+00 : f32
    %224 = vector.broadcast %cst_82 : f32 to vector<1x128xf32>
    %225 = arith.addf %223, %224 : vector<1x128xf32>
    %226 = arith.divf %206, %225 : vector<1x128xf32>
    %cst_83 = arith.constant 1.000000e+00 : f32
    %227 = vector.broadcast %cst_83 : f32 to vector<1x128xf32>
    %228 = arith.addf %227, %226 : vector<1x128xf32>
    %cst_84 = arith.constant 5.000000e-01 : f32
    %229 = vector.broadcast %cst_84 : f32 to vector<1x128xf32>
    %230 = arith.mulf %229, %228 : vector<1x128xf32>
    %c0_85 = arith.constant 0 : index
    %231 = memref.load %arg4[%c0_85] : memref<3xf32, #tpu.memory_space<smem>>
    %232 = arith.mulf %230, %141 : vector<1x128xf32>
    %cst_86 = arith.constant 9.99999993E-9 : f32
    %233 = vector.broadcast %cst_86 : f32 to vector<1x128xf32>
    %234 = arith.addf %232, %233 : vector<1x128xf32>
    %235 = math.sqrt %234 : vector<1x128xf32>
    %cst_87 = arith.constant 1.000000e+00 : f32
    %236 = vector.broadcast %cst_87 : f32 to vector<1x128xf32>
    %237 = arith.subf %236, %230 : vector<1x128xf32>
    %cst_88 = arith.constant 1.000000e+00 : f32
    %238 = vector.broadcast %cst_88 : f32 to vector<1x128xf32>
    %239 = arith.subf %238, %141 : vector<1x128xf32>
    %240 = arith.mulf %237, %239 : vector<1x128xf32>
    %cst_89 = arith.constant 9.99999993E-9 : f32
    %241 = vector.broadcast %cst_89 : f32 to vector<1x128xf32>
    %242 = arith.addf %240, %241 : vector<1x128xf32>
    %243 = math.sqrt %242 : vector<1x128xf32>
    %244 = arith.addf %235, %243 : vector<1x128xf32>
    %cst_90 = arith.constant 1.000000e+00 : f32
    %245 = vector.broadcast %cst_90 : f32 to vector<1x128xf32>
    %246 = arith.subf %245, %244 : vector<1x128xf32>
    %247 = arith.mulf %246, %22 : vector<1x128xf32>
    %248 = vector.shape_cast %247 : vector<1x128xf32> to vector<1x1x128xf32>
    %cst_91 = arith.constant dense<0.000000e+00> : vector<1xf32>
    %249 = vector.multi_reduction <add>, %248, %cst_91 [1, 2] : vector<1x1x128xf32> to vector<1xf32>
    %250 = vector.shape_cast %249 : vector<1xf32> to vector<1x1x1xf32>
    %251 = vector.extract %250[0, 0, 0] : f32 from vector<1x1x1xf32>
    %252 = arith.addf %231, %251 : f32
    %c0_92 = arith.constant 0 : index
    %253 = memref.load %arg4[%c0_92] : memref<3xf32, #tpu.memory_space<smem>>
    memref.store %252, %arg4[%c0_92] : memref<3xf32, #tpu.memory_space<smem>>
    %c0_i32_93 = arith.constant 0 : i32
    %254 = arith.cmpi eq, %arg0, %c0_i32_93 : i32
    %255 = arith.extui %254 : i1 to i32
    %c0_i32_94 = arith.constant 0 : i32
    %256 = arith.cmpi ne, %255, %c0_i32_94 : i32
    scf.if %256 {
      %c2_95 = arith.constant 2 : index
      %257 = memref.load %arg4[%c2_95] : memref<3xf32, #tpu.memory_space<smem>>
      %cst_96 = arith.constant 0.00130208337 : f32
      %258 = arith.mulf %257, %cst_96 : f32
      %c2_97 = arith.constant 2 : index
      %259 = memref.load %arg3[%c2_97] : memref<3xf32, #tpu.memory_space<smem>>
      memref.store %258, %arg3[%c2_97] : memref<3xf32, #tpu.memory_space<smem>>
      %c1_98 = arith.constant 1 : index
      %260 = memref.load %arg4[%c1_98] : memref<3xf32, #tpu.memory_space<smem>>
      %cst_99 = arith.constant 0.00260416674 : f32
      %261 = arith.mulf %260, %cst_99 : f32
      %c1_100 = arith.constant 1 : index
      %262 = memref.load %arg3[%c1_100] : memref<3xf32, #tpu.memory_space<smem>>
      memref.store %261, %arg3[%c1_100] : memref<3xf32, #tpu.memory_space<smem>>
      %c0_101 = arith.constant 0 : index
      %263 = memref.load %arg4[%c0_101] : memref<3xf32, #tpu.memory_space<smem>>
      %cst_102 = arith.constant 7.812500e-03 : f32
      %264 = arith.mulf %263, %cst_102 : f32
      %c0_103 = arith.constant 0 : index
      %265 = memref.load %arg3[%c0_103] : memref<3xf32, #tpu.memory_space<smem>>
      memref.store %264, %arg3[%c0_103] : memref<3xf32, #tpu.memory_space<smem>>
    } else {
    }
    return
  }
  func.func @transform_0(%arg0: i32) -> (i32, i32, i32, i32) {
    %c0_i32 = arith.constant 0 : i32
    %c0_i32_0 = arith.constant 0 : i32
    %c0_i32_1 = arith.constant 0 : i32
    %c0_i32_2 = arith.constant 0 : i32
    return %c0_i32, %c0_i32_0, %arg0, %c0_i32_1 : i32, i32, i32, i32
  }
  func.func @transform_1(%arg0: i32) -> (i32, i32) {
    %c0_i32 = arith.constant 0 : i32
    %c0_i32_0 = arith.constant 0 : i32
    return %arg0, %c0_i32 : i32, i32
  }
  func.func @transform_2(%arg0: i32) -> i32 {
    %c0_i32 = arith.constant 0 : i32
    %c0_i32_0 = arith.constant 0 : i32
    return %c0_i32 : i32
  }
}

</mosaic_0001>

<llo_original>
// kernel: tpu_custom_call.1
$region0: #{tpu_custom_call.1}
  #allocation0 [shape = 'u32[]', space=smem, size = 0x4, offset = 0x4, fixed_abs, tag = 'smem constant byte address 0x4 - core index']
  #allocation1 [shape = 'u32[144,128]{1,0:T(1,128)}', space=vmem, size = 0x12000, scoped, tag = 'internal scratch']
  #allocation2 [shape = 'f32[3]{0:T(128)}', space=smem, size = 0x200, scoped, tag = 'scratch operand']
  %s0 = inlined_call_operand.hbm [shape: f32[4,3,1,128], index: 0, kind: input, shape index: {}]
  %s1 = inlined_call_operand.vmem [shape: f32[1,128], index: 1, kind: input, shape index: {}]
  %s2 = inlined_call_operand.hbm [shape: f32[3], index: 2, kind: output, shape index: {}]
  %s3 = sld [smem:[#allocation0]]
  $region30: #{tpu_custom_call.1} parent=0
    _
  %s5 = ssub.s32 1, %s3
  %s6 = scalar_select 0, %s5, %s3
  $region1: #{tpu_custom_call.1} parent=0
    #allocation3 [shape = 'u8[6144]{0}', space=vmem, size = 0x1800, scoped, tag = 'input window, operand 0, single buffered']
    #allocation4 [shape = 's32[1]{0}', space=sflag, size = 0x4, scoped, tag = 'scoped memory for tpu_custom_call.1']
    #allocation5 [shape = 's32[1]{0}', space=sflag, size = 0x4, scoped, tag = 'scoped memory for tpu_custom_call.1']
    #allocation6 [shape = 'u8[512]{0}', space=smem, size = 0x200, scoped, tag = 'output window, operand 0, single buffered']
    %7 = vsyncpa [#allocation4], 0
    %8 = vsyncpa [#allocation5], 0
    // Predicated region
    $region2: #{tpu_custom_call.1} parent=1 // pred_check
      _
    $region3: #{tpu_custom_call.1} parent=1 // pred_check_branch
      %10 = sbr.rel (0) target = $region5
    $region4: #{tpu_custom_call.1} parent=1 // pred_region
      %s12 = ssub.s32 192, 192
      %13 = vsyncadd [#allocation4], %s12
      %s14 = sshll.u32 [#allocation3], 4
      %s15 = int_to_ptr.vmem [resolvable:$true] %s14
      %20 = dma.hbm_to_vmem [thread:$0]  %s0, 192, %s15, [#allocation4], 16, 16, 1
    $region5: #{tpu_custom_call.1} parent=1 // pred_fallthru
      _
    // Predicated region
    $region6: #{tpu_custom_call.1} parent=1 // pred_check
      _
    $region7: #{tpu_custom_call.1} parent=1 // pred_check_branch
      %22 = sbr.rel (0) target = $region9
    $region8: #{tpu_custom_call.1} parent=1 // pred_region
      _
    $region9: #{tpu_custom_call.1} parent=1 // pred_fallthru
      _
    // Predicated region
    $region10: #{tpu_custom_call.1} parent=1 // pred_check
      _
    $region11: #{tpu_custom_call.1} parent=1 // pred_check_branch
      %24 = sbr.rel (0) target = $region13
    $region12: #{tpu_custom_call.1} parent=1 // pred_region
      %25 = dma.done [#allocation4], 192
    $region13: #{tpu_custom_call.1} parent=1 // pred_fallthru
      _
    %p26 = scmp.eq.s32.totalorder 0, 0
    // Predicated region
    $region14: #{tpu_custom_call.1} parent=1 // pred_check
      %p27 = pneg %p26
    $region15: #{tpu_custom_call.1} parent=1 // pred_check_branch
      %29 = sbr.rel (%p27) target = $region17
    $region16: #{tpu_custom_call.1} parent=1 // pred_region
      %s30 = scalar_lea.smem [#allocation2], 0
      %31 = sst [smem:[%s30]] 0.0
      %s32 = scalar_lea.smem [#allocation2], 1
      %33 = sst [smem:[%s32]] 0.0
      %s34 = scalar_lea.smem [#allocation2], 2
      %35 = sst [smem:[%s34]] 0.0
    $region17: #{tpu_custom_call.1} parent=1 // pred_fallthru
      _
    %v36 = vld [vmem:[#allocation3] sm:$0x1]
    %v37 = vld [vmem:[#allocation3 + $0x1] sm:$0x1]
    %v38 = vld [vmem:[#allocation3 + $0x2] sm:$0x1]
    %s39 = scalar_lea.vmem [#allocation3], 3
    %v40 = vld [vmem:[%s39] sm:$0x1]
    %v41 = vld [vmem:[%s39 + $0x1] sm:$0x1]
    %v42 = vld [vmem:[%s39 + $0x2] sm:$0x1]
    %s43 = scalar_lea.vmem [#allocation3], 6
    %v44 = vld [vmem:[%s43] sm:$0x1]
    %v45 = vld [vmem:[%s43 + $0x1] sm:$0x1]
    %v46 = vld [vmem:[%s43 + $0x2] sm:$0x1]
    %s47 = scalar_lea.vmem [#allocation3], 9
    %v48 = vld [vmem:[%s47] sm:$0x1]
    %v49 = vld [vmem:[%s47 + $0x1] sm:$0x1]
    %v50 = vld [vmem:[%s47 + $0x2] sm:$0x1]
    %v51 = vlaneseq
    %v52 = vshrl.u32 %v51, 7
    %v53 = vlaneseq
    %v54 = vand.u32 %v53, 127
    %v55 = vstv 0
    %v56 = vadd.s32 %v55, %v52
    %v57 = vmul.u32 %v56, 128
    %v58 = vadd.s32 %v57, %v54
    %vm59 = vcmp.lt.s32.totalorder %v58, 128
    %v60 = vsel %vm59, 1, 0
    %v61 = vcvt.s32.f32 %v60
    %v62 = vsub.f32 %v36, %v44
    %v63 = vsub.f32 %v37, %v45
    %v64 = vsub.f32 %v38, %v46
    %v65 = vadd.f32 %v40, %v48
    %v66 = vadd.f32 %v41, %v49
    %v67 = vadd.f32 %v42, %v50
    %v68 = vmul.f32 %v65, 2.0
    %v69 = vmul.f32 %v66, 2.0
    %v70 = vmul.f32 %v67, 2.0
    %v71 = vrsqrt.pop %v68
    %v72 = vrsqrt.pop %v69
    %v73 = vrsqrt.pop %v70
    %v74 = vmul.f32 %v62, %v71
    %v75 = vmul.f32 %v63, %v72
    %v76 = vmul.f32 %v64, %v73
    %v77 = vmax.f32 %v74, -3.832507
    %v78 = vmax.f32 %v75, -3.832507
    %v79 = vmax.f32 %v76, -3.832507
    %v80 = vmin.f32 %v77, 3.832507
    %v81 = vmin.f32 %v78, 3.832507
    %v82 = vmin.f32 %v79, 3.832507
    %v83 = vmul.f32 %v80, %v80
    %v84 = vmul.f32 %v81, %v81
    %v85 = vmul.f32 %v82, %v82
    %v86 = vmul.f32 %v83, 0.00022905065
    %v87 = vmul.f32 %v84, 0.00022905065
    %v88 = vmul.f32 %v85, 0.00022905065
    %v89 = vadd.f32 %v86, 0.003408291
    %v90 = vadd.f32 %v87, 0.003408291
    %v91 = vadd.f32 %v88, 0.003408291
    %v92 = vmul.f32 %v89, %v83
    %v93 = vmul.f32 %v90, %v84
    %v94 = vmul.f32 %v91, %v85
    %v95 = vadd.f32 %v92, 0.050955694
    %v96 = vadd.f32 %v93, 0.050955694
    %v97 = vadd.f32 %v94, 0.050955694
    %v98 = vmul.f32 %v95, %v83
    %v99 = vmul.f32 %v96, %v84
    %v100 = vmul.f32 %v97, %v85
    %v101 = vadd.f32 %v98, 0.18520832
    %v102 = vadd.f32 %v99, 0.18520832
    %v103 = vadd.f32 %v100, 0.18520832
    %v104 = vmul.f32 %v101, %v83
    %v105 = vmul.f32 %v102, %v84
    %v106 = vmul.f32 %v103, %v85
    %v107 = vadd.f32 %v104, 1.1283791
    %v108 = vadd.f32 %v105, 1.1283791
    %v109 = vadd.f32 %v106, 1.1283791
    %v110 = vmul.f32 %v80, %v107
    %v111 = vmul.f32 %v81, %v108
    %v112 = vmul.f32 %v82, %v109
    %v113 = vmul.f32 %v83, -1.1791603e-07
    %v114 = vmul.f32 %v84, -1.1791603e-07
    %v115 = vmul.f32 %v85, -1.1791603e-07
    %v116 = vadd.f32 %v113, 2.3547966e-05
    %v117 = vadd.f32 %v114, 2.3547966e-05
    %v118 = vadd.f32 %v115, 2.3547966e-05
    %v119 = vmul.f32 %v116, %v83
    %v120 = vmul.f32 %v117, %v84
    %v121 = vmul.f32 %v118, %v85
    %v122 = vadd.f32 %v119, 0.0010179626
    %v123 = vadd.f32 %v120, 0.0010179626
    %v124 = vadd.f32 %v121, 0.0010179626
    %v125 = vmul.f32 %v122, %v83
    %v126 = vmul.f32 %v123, %v84
    %v127 = vmul.f32 %v124, %v85
    %v128 = vadd.f32 %v125, 0.01407047
    %v129 = vadd.f32 %v126, 0.01407047
    %v130 = vadd.f32 %v127, 0.01407047
    %v131 = vmul.f32 %v128, %v83
    %v132 = vmul.f32 %v129, %v84
    %v133 = vmul.f32 %v130, %v85
    %v134 = vadd.f32 %v131, 0.11098505
    %v135 = vadd.f32 %v132, 0.11098505
    %v136 = vadd.f32 %v133, 0.11098505
    %v137 = vmul.f32 %v134, %v83
    %v138 = vmul.f32 %v135, %v84
    %v139 = vmul.f32 %v136, %v85
    %v140 = vadd.f32 %v137, 0.49746925
    %v141 = vadd.f32 %v138, 0.49746925
    %v142 = vadd.f32 %v139, 0.49746925
    %v143 = vmul.f32 %v140, %v83
    %v144 = vmul.f32 %v141, %v84
    %v145 = vmul.f32 %v142, %v85
    %v146 = vadd.f32 %v143, 1.0
    %v147 = vadd.f32 %v144, 1.0
    %v148 = vadd.f32 %v145, 1.0
    %v149 = vrcp.pop %v146
    %v150 = vmul.f32 %v110, %v149
    %v151 = vrcp.pop %v147
    %v152 = vmul.f32 %v111, %v151
    %v153 = vrcp.pop %v148
    %v154 = vmul.f32 %v112, %v153
    %v155 = vadd.f32 %v150, 1.0
    %v156 = vadd.f32 %v152, 1.0
    %v157 = vadd.f32 %v154, 1.0
    %v158 = vmul.f32 %v155, 0.5
    %v159 = vmul.f32 %v156, 0.5
    %v160 = vmul.f32 %v157, 0.5
    %v161 = vmul.f32 %v158, %v159
    %v162 = vadd.f32 %v161, 1e-08
    %v163 = vrsqrt.pop %v162
    %v164 = vmul.f32 %v162, %v163
    %vm165 = vcmp.eq.f32.partialorder %v162, inf
    %v166 = vsel %vm165, %v162, %v164
    %vm167 = vcmp.eq.f32.partialorder %v162, 0.0
    %v168 = vand.u32 %v162, 2147483648
    %v169 = vsel %vm167, %v168, %v166
    %v170 = vsub.f32 1.0, %v158
    %v171 = vsub.f32 1.0, %v159
    %v172 = vmul.f32 %v170, %v171
    %v173 = vadd.f32 %v172, 1e-08
    %v174 = vrsqrt.pop %v173
    %v175 = vmul.f32 %v173, %v174
    %vm176 = vcmp.eq.f32.partialorder %v173, inf
    %v177 = vsel %vm176, %v173, %v175
    %vm178 = vcmp.eq.f32.partialorder %v173, 0.0
    %v179 = vand.u32 %v173, 2147483648
    %v180 = vsel %vm178, %v179, %v177
    %v181 = vadd.f32 %v169, %v180
    %v182 = vsub.f32 1.0, %v181
    %v183 = vadd.f32 %v182, 0.0
    %v184 = vmul.f32 %v158, %v160
    %v185 = vadd.f32 %v184, 1e-08
    %v186 = vrsqrt.pop %v185
    %v187 = vmul.f32 %v185, %v186
    %vm188 = vcmp.eq.f32.partialorder %v185, inf
    %v189 = vsel %vm188, %v185, %v187
    %vm190 = vcmp.eq.f32.partialorder %v185, 0.0
    %v191 = vand.u32 %v185, 2147483648
    %v192 = vsel %vm190, %v191, %v189
    %v193 = vsub.f32 1.0, %v160
    %v194 = vmul.f32 %v170, %v193
    %v195 = vadd.f32 %v194, 1e-08
    %v196 = vrsqrt.pop %v195
    %v197 = vmul.f32 %v195, %v196
    %vm198 = vcmp.eq.f32.partialorder %v195, inf
    %v199 = vsel %vm198, %v195, %v197
    %vm200 = vcmp.eq.f32.partialorder %v195, 0.0
    %v201 = vand.u32 %v195, 2147483648
    %v202 = vsel %vm200, %v201, %v199
    %v203 = vadd.f32 %v192, %v202
    %v204 = vsub.f32 1.0, %v203
    %v205 = vadd.f32 %v183, %v204
    %v206 = vmul.f32 %v159, %v160
    %v207 = vadd.f32 %v206, 1e-08
    %v208 = vrsqrt.pop %v207
    %v209 = vmul.f32 %v207, %v208
    %vm210 = vcmp.eq.f32.partialorder %v207, inf
    %v211 = vsel %vm210, %v207, %v209
    %vm212 = vcmp.eq.f32.partialorder %v207, 0.0
    %v213 = vand.u32 %v207, 2147483648
    %v214 = vsel %vm212, %v213, %v211
    %v215 = vmul.f32 %v171, %v193
    %v216 = vadd.f32 %v215, 1e-08
    %v217 = vrsqrt.pop %v216
    %v218 = vmul.f32 %v216, %v217
    %vm219 = vcmp.eq.f32.partialorder %v216, inf
    %v220 = vsel %vm219, %v216, %v218
    %vm221 = vcmp.eq.f32.partialorder %v216, 0.0
    %v222 = vand.u32 %v216, 2147483648
    %v223 = vsel %vm221, %v222, %v220
    %v224 = vadd.f32 %v214, %v223
    %v225 = vsub.f32 1.0, %v224
    %v226 = vadd.f32 %v205, %v225
    %s227 = sld [smem:[#allocation2 + $0x2]]
    %v228 = vmul.f32 %v226, %v61
    %vm229 = vcmask 1040384
    %v230 = vsel %vm229, %v228, 0.0
    %231 = vadd.xlane.f32.xlu0 %v230
    %v232 = vpop.xlane.xlu0 %231
    %v233 = vrot.slane %v232, 4
    %v234 = vadd.f32 %v232, %v233
    %v235 = vrot.slane %v234, 2
    %v236 = vadd.f32 %v234, %v235
    %v237 = vrot.slane %v236, 1
    %v238 = vadd.f32 %v236, %v237
    %s239 = vtos %v238
    %s240 = sadd.f32 %s227, %s239
    %s241 = scalar_lea.smem [#allocation2], 2
    %242 = sst [smem:[%s241]] %s240
    %v243 = vld [vmem:[%s1] sm:$0x1]
    %v244 = vmul.f32 %v158, %v243
    %v245 = vmul.f32 %v159, %v243
    %v246 = vmul.f32 %v160, %v243
    %v247 = vadd.f32 %v244, 1e-08
    %v248 = vadd.f32 %v245, 1e-08
    %v249 = vadd.f32 %v246, 1e-08
    %v250 = vrsqrt.pop %v247
    %v251 = vmul.f32 %v247, %v250
    %vm252 = vcmp.eq.f32.partialorder %v247, inf
    %v253 = vsel %vm252, %v247, %v251
    %vm254 = vcmp.eq.f32.partialorder %v247, 0.0
    %v255 = vand.u32 %v247, 2147483648
    %v256 = vsel %vm254, %v255, %v253
    %v257 = vrsqrt.pop %v248
    %v258 = vmul.f32 %v248, %v257
    %vm259 = vcmp.eq.f32.partialorder %v248, inf
    %v260 = vsel %vm259, %v248, %v258
    %vm261 = vcmp.eq.f32.partialorder %v248, 0.0
    %v262 = vand.u32 %v248, 2147483648
    %v263 = vsel %vm261, %v262, %v260
    %v264 = vrsqrt.pop %v249
    %v265 = vmul.f32 %v249, %v264
    %vm266 = vcmp.eq.f32.partialorder %v249, inf
    %v267 = vsel %vm266, %v249, %v265
    %vm268 = vcmp.eq.f32.partialorder %v249, 0.0
    %v269 = vand.u32 %v249, 2147483648
    %v270 = vsel %vm268, %v269, %v267
    %v271 = vsub.f32 1.0, %v243
    %v272 = vmul.f32 %v170, %v271
    %v273 = vmul.f32 %v171, %v271
    %v274 = vmul.f32 %v193, %v271
    %v275 = vadd.f32 %v272, 1e-08
    %v276 = vadd.f32 %v273, 1e-08
    %v277 = vadd.f32 %v274, 1e-08
    %v278 = vrsqrt.pop %v275
    %v279 = vmul.f32 %v275, %v278
    %vm280 = vcmp.eq.f32.partialorder %v275, inf
    %v281 = vsel %vm280, %v275, %v279
    %vm282 = vcmp.eq.f32.partialorder %v275, 0.0
    %v283 = vand.u32 %v275, 2147483648
    %v284 = vsel %vm282, %v283, %v281
    %v285 = vrsqrt.pop %v276
    %v286 = vmul.f32 %v276, %v285
    %vm287 = vcmp.eq.f32.partialorder %v276, inf
    %v288 = vsel %vm287, %v276, %v286
    %vm289 = vcmp.eq.f32.partialorder %v276, 0.0
    %v290 = vand.u32 %v276, 2147483648
    %v291 = vsel %vm289, %v290, %v288
    %v292 = vrsqrt.pop %v277
    %v293 = vmul.f32 %v277, %v292
    %vm294 = vcmp.eq.f32.partialorder %v277, inf
    %v295 = vsel %vm294, %v277, %v293
    %vm296 = vcmp.eq.f32.partialorder %v277, 0.0
    %v297 = vand.u32 %v277, 2147483648
    %v298 = vsel %vm296, %v297, %v295
    %v299 = vadd.f32 %v256, %v284
    %v300 = vadd.f32 %v263, %v291
    %v301 = vadd.f32 %v270, %v298
    %v302 = vsub.f32 1.0, %v299
    %v303 = vsub.f32 1.0, %v300
    %v304 = vsub.f32 1.0, %v301
    %v305 = vsel %vm229, %v302, 0.0
    %v306 = vsel %vm229, %v303, 0.0
    %v307 = vadd.f32 %v305, %v306
    %v308 = vsel %vm229, %v304, 0.0
    %v309 = vadd.f32 %v307, %v308
    %s310 = sld [smem:[#allocation2 + $0x1]]
    %v311 = vmul.f32 %v309, %v61
    %v312 = vsel %vm229, %v311, 0.0
    %313 = vadd.xlane.f32.xlu0 %v312
    %v314 = vpop.xlane.xlu0 %313
    %v315 = vrot.slane %v314, 4
    %v316 = vadd.f32 %v314, %v315
    %v317 = vrot.slane %v316, 2
    %v318 = vadd.f32 %v316, %v317
    %v319 = vrot.slane %v318, 1
    %v320 = vadd.f32 %v318, %v319
    %s321 = vtos %v320
    %s322 = sadd.f32 %s310, %s321
    %s323 = scalar_lea.smem [#allocation2], 1
    %324 = sst [smem:[%s323]] %s322
    %v325 = vsel %vm229, %v36, 0.0
    %v326 = vsel %vm229, %v37, 0.0
    %v327 = vadd.f32 %v325, %v326
    %v328 = vsel %vm229, %v38, 0.0
    %v329 = vadd.f32 %v327, %v328
    %v330 = vmul.f32 %v329, 0.33333334
    %v331 = vsel %vm229, %v40, 0.0
    %v332 = vsel %vm229, %v41, 0.0
    %v333 = vadd.f32 %v331, %v332
    %v334 = vsel %vm229, %v42, 0.0
    %v335 = vadd.f32 %v333, %v334
    %v336 = vmul.f32 %v335, 0.11111111
    %v337 = vsel %vm229, %v44, 0.0
    %v338 = vsel %vm229, %v45, 0.0
    %v339 = vadd.f32 %v337, %v338
    %v340 = vsel %vm229, %v46, 0.0
    %v341 = vadd.f32 %v339, %v340
    %v342 = vmul.f32 %v341, 0.33333334
    %v343 = vsel %vm229, %v48, 0.0
    %v344 = vsel %vm229, %v49, 0.0
    %v345 = vadd.f32 %v343, %v344
    %v346 = vsel %vm229, %v50, 0.0
    %v347 = vadd.f32 %v345, %v346
    %v348 = vmul.f32 %v347, 0.11111111
    %v349 = vsub.f32 %v330, %v342
    %v350 = vadd.f32 %v336, %v348
    %v351 = vmul.f32 %v350, 2.0
    %v352 = vrsqrt.pop %v351
    %v353 = vmul.f32 %v349, %v352
    %v354 = vmax.f32 %v353, -3.832507
    %v355 = vmin.f32 %v354, 3.832507
    %v356 = vmul.f32 %v355, %v355
    %v357 = vmul.f32 %v356, 0.00022905065
    %v358 = vadd.f32 %v357, 0.003408291
    %v359 = vmul.f32 %v358, %v356
    %v360 = vadd.f32 %v359, 0.050955694
    %v361 = vmul.f32 %v360, %v356
    %v362 = vadd.f32 %v361, 0.18520832
    %v363 = vmul.f32 %v362, %v356
    %v364 = vadd.f32 %v363, 1.1283791
    %v365 = vmul.f32 %v355, %v364
    %v366 = vmul.f32 %v356, -1.1791603e-07
    %v367 = vadd.f32 %v366, 2.3547966e-05
    %v368 = vmul.f32 %v367, %v356
    %v369 = vadd.f32 %v368, 0.0010179626
    %v370 = vmul.f32 %v369, %v356
    %v371 = vadd.f32 %v370, 0.01407047
    %v372 = vmul.f32 %v371, %v356
    %v373 = vadd.f32 %v372, 0.11098505
    %v374 = vmul.f32 %v373, %v356
    %v375 = vadd.f32 %v374, 0.49746925
    %v376 = vmul.f32 %v375, %v356
    %v377 = vadd.f32 %v376, 1.0
    %v378 = vrcp.pop %v377
    %v379 = vmul.f32 %v365, %v378
    %v380 = vadd.f32 %v379, 1.0
    %v381 = vmul.f32 %v380, 0.5
    %s382 = sld [smem:[#allocation2]]
    %v383 = vmul.f32 %v381, %v243
    %v384 = vadd.f32 %v383, 1e-08
    %v385 = vrsqrt.pop %v384
    %v386 = vmul.f32 %v384, %v385
    %vm387 = vcmp.eq.f32.partialorder %v384, inf
    %v388 = vsel %vm387, %v384, %v386
    %vm389 = vcmp.eq.f32.partialorder %v384, 0.0
    %v390 = vand.u32 %v384, 2147483648
    %v391 = vsel %vm389, %v390, %v388
    %v392 = vsub.f32 1.0, %v381
    %v393 = vmul.f32 %v392, %v271
    %v394 = vadd.f32 %v393, 1e-08
    %v395 = vrsqrt.pop %v394
    %v396 = vmul.f32 %v394, %v395
    %vm397 = vcmp.eq.f32.partialorder %v394, inf
    %v398 = vsel %vm397, %v394, %v396
    %vm399 = vcmp.eq.f32.partialorder %v394, 0.0
    %v400 = vand.u32 %v394, 2147483648
    %v401 = vsel %vm399, %v400, %v398
    %v402 = vadd.f32 %v391, %v401
    %v403 = vsub.f32 1.0, %v402
    %v404 = vmul.f32 %v403, %v61
    %v405 = vsel %vm229, %v404, 0.0
    %406 = vadd.xlane.f32.xlu0 %v405
    %v407 = vpop.xlane.xlu0 %406
    %v408 = vrot.slane %v407, 4
    %v409 = vadd.f32 %v407, %v408
    %v410 = vrot.slane %v409, 2
    %v411 = vadd.f32 %v409, %v410
    %v412 = vrot.slane %v411, 1
    %v413 = vadd.f32 %v411, %v412
    %s414 = vtos %v413
    %s415 = sadd.f32 %s382, %s414
    %s416 = scalar_lea.smem [#allocation2], 0
    %417 = sst [smem:[%s416]] %s415
    // Predicated region
    $region18: #{tpu_custom_call.1} parent=1 // pred_check
      %p418 = pneg %p26
    $region19: #{tpu_custom_call.1} parent=1 // pred_check_branch
      %420 = sbr.rel (%p418) target = $region21
    $region20: #{tpu_custom_call.1} parent=1 // pred_region
      %s421 = sld [smem:[#allocation2 + $0x2]]
      %s422 = smul.f32 %s421, 0.0013020834
      %s423 = scalar_lea.smem [#allocation6], 2
      %424 = sst [smem:[%s423]] %s422
      %s425 = sld [smem:[#allocation2 + $0x1]]
      %s426 = smul.f32 %s425, 0.0026041667
      %s427 = scalar_lea.smem [#allocation6], 1
      %428 = sst [smem:[%s427]] %s426
      %s429 = sld [smem:[#allocation2]]
      %s430 = smul.f32 %s429, 0.0078125
      %s431 = scalar_lea.smem [#allocation6], 0
      %432 = sst [smem:[%s431]] %s430
    $region21: #{tpu_custom_call.1} parent=1 // pred_fallthru
      _
    // Predicated region
    $region22: #{tpu_custom_call.1} parent=1 // pred_check
      _
    $region23: #{tpu_custom_call.1} parent=1 // pred_check_branch
      %434 = sbr.rel (0) target = $region25
    $region24: #{tpu_custom_call.1} parent=1 // pred_region
      %s436 = ssub.s32 16, 16
      %437 = vsyncadd [#allocation5], %s436
      %440 = dma.smem_to_hbm [#allocation6], 16, %s2, [#allocation5]
    $region25: #{tpu_custom_call.1} parent=1 // pred_fallthru
      _
    // Predicated region
    $region26: #{tpu_custom_call.1} parent=1 // pred_check
      _
    $region27: #{tpu_custom_call.1} parent=1 // pred_check_branch
      %442 = sbr.rel (0) target = $region29
    $region28: #{tpu_custom_call.1} parent=1 // pred_region
      %443 = dma.done [#allocation5], 16
    $region29: #{tpu_custom_call.1} parent=1 // pred_fallthru
      _
    %444 = sfence
    %445 = vsyncpa [#allocation4], 1
    %446 = vsyncpa [#allocation5], 1

</llo_original>
